<compile_context>
chip_gen: v5e
topology: v5e:2x2
jax: 0.10.0
libtpu: 0.0.40
codegen_flags: <defaults>
</compile_context>

<pallas_src>
import numpy as np
import jax
import jax.numpy as jnp
from jax.experimental import pallas as pl
from jax.experimental.pallas import tpu as pltpu


def _spatial_attention_kernel(wa_ref, wm_ref, b_ref, x_ref, o_ref):
    # wa_ref, wm_ref: (HW, HW) f32 VMEM  banded conv matrices (boundary masks folded in)
    # b_ref:          (1,)     f32 SMEM  conv bias
    # x_ref, o_ref:   (nb, C, HW)        input / output blocks
    xf = x_ref[...].astype(jnp.float32)            # live only through the reductions
    avg = jnp.mean(xf, axis=1)                     # (nb, HW) channel squeeze
    mx = jnp.max(xf, axis=1)                       # (nb, HW)

    # 7x7 zero-padded conv == banded (HW, HW) matmuls on the MXU.
    acc = (jnp.dot(avg, wa_ref[...], preferred_element_type=jnp.float32)
           + jnp.dot(mx, wm_ref[...], preferred_element_type=jnp.float32))
    attn = jax.nn.sigmoid(acc + b_ref[0])          # (nb, HW)

    # Re-read x for the scale so no upcast block stays live across the matmul.
    o_ref[...] = (x_ref[...] * attn[:, None, :].astype(x_ref.dtype)).astype(o_ref.dtype)


def _banded_conv_matrices(conv_w, H, W):
    """Fold a (1, 2, K, K) conv (zero padding K//2) into two (HW, HW) f32 matrices.

    Wa[p, q] (Wm[p, q]) is the weight multiplying the avg (max) feature map at
    flat pixel p when producing output pixel q; out-of-image taps are simply
    absent from the band, so the zero-padding masks are built in.
    """
    _, _, K, _ = conv_w.shape
    P = K // 2
    HW = H * W
    hh, ww = np.meshgrid(np.arange(H), np.arange(W), indexing="ij")
    q_base = (hh * W + ww).reshape(-1)
    p_list, q_list, t_list = [], [], []
    t = 0
    for dy in range(-P, P + 1):
        for dx in range(-P, P + 1):
            h2, w2 = hh + dy, ww + dx
            ok = ((h2 >= 0) & (h2 < H) & (w2 >= 0) & (w2 < W)).reshape(-1)
            p = (h2 * W + w2).reshape(-1)
            p_list.append(p[ok])
            q_list.append(q_base[ok])
            t_list.append(np.full(int(ok.sum()), t, dtype=np.int32))
            t += 1
    p_all = np.concatenate(p_list)
    q_all = np.concatenate(q_list)
    t_all = np.concatenate(t_list)

    w_taps = conv_w.reshape(2, K * K).astype(jnp.float32)   # [avg taps; max taps]
    wa = jnp.zeros((HW, HW), jnp.float32).at[p_all, q_all].add(w_taps[0, t_all])
    wm = jnp.zeros((HW, HW), jnp.float32).at[p_all, q_all].add(w_taps[1, t_all])
    return wa, wm


def _tensorcores_per_chip():
    """2 on v7x-class (2-TC) chips, else 1. Best-effort; never raises."""
    try:
        kind = (jax.devices()[0].device_kind or "").lower()
    except Exception:
        return 1
    return 2 if ("7x" in kind or "v7" in kind) else 1


def spatial_attention(x, conv_w, conv_b, *, batch_block=None, vmem_limit_bytes=None):
    """x: (N, C, H, W); conv_w: (1, 2, K, K); conv_b: (1,). Returns (N, C, H, W)."""
    N, C, H, W = x.shape
    O, I, KH, KW = conv_w.shape
    assert O == 1 and I == 2 and KH == KW, "SpatialAttention conv must be (1, 2, K, K)"
    HW = H * W

    # TODO(synk): if H*W is not a multiple of 128, pad the spatial axis to a
    # 128-multiple (and mask) to keep lane-dense stores; not needed here (HW=256).
    # TODO(synk): for very large H*W the two (HW, HW) f32 conv matrices no longer
    # fit VMEM; fall back to a shift+mask tap conv (or tile the HW axis) there.

    xr = x.reshape(N, C, HW)
    wa, wm = _banded_conv_matrices(conv_w, H, W)
    b_flat = conv_b.reshape(1).astype(jnp.float32)

    itemsize = x.dtype.itemsize
    if batch_block is None:
        # Double-buffered in + out blocks under a budget that, together with the
        # resident conv matrices and f32 temporaries, fits every generation's
        # default scoped VMEM once vmem_limit_bytes is raised below.
        bytes_per_n = 2 * 2 * C * HW * itemsize
        budget = 8 * 1024 * 1024
        nb = max(1, min(N, budget // max(bytes_per_n, 1)))
        # Keep >= 2 grid steps only where it buys parallelism (2-TC chips, v7x);
        # on 1-TC v5e/v6e a bigger block amortizes per-step overhead instead.
        if _tensorcores_per_chip() >= 2 and N >= 2:
            nb = min(nb, pl.cdiv(N, 2))
        batch_block = nb
    nb = int(batch_block)
    grid = (pl.cdiv(N, nb),)          # partial last block is masked by Pallas

    if vmem_limit_bytes is None:
        need = (4 * nb * C * HW * itemsize        # in + out blocks, double-buffered
                + 2 * 2 * HW * HW * 4             # Wa + Wm (double-buffered worst case)
                + 8 * nb * HW * 4                 # avg/mx/acc/attn f32 temporaries
                + (4 << 20))                      # headroom
        # Above every default scoped limit, below physical VMEM on v5e/v6e/v7x.
        vmem_limit_bytes = int(min(max(need, 16 << 20), 48 << 20))

    out = pl.pallas_call(
        _spatial_attention_kernel,
        out_shape=jax.ShapeDtypeStruct((N, C, HW), x.dtype),
        grid=grid,
        in_specs=[
            pl.BlockSpec((HW, HW), lambda n: (0, 0)),               # Wa (resident)
            pl.BlockSpec((HW, HW), lambda n: (0, 0)),               # Wm (resident)
            pl.BlockSpec(memory_space=pltpu.MemorySpace.SMEM),      # conv bias
            pl.BlockSpec((nb, C, HW), lambda n: (n, 0, 0)),         # x block
        ],
        out_specs=pl.BlockSpec((nb, C, HW), lambda n: (n, 0, 0)),
        compiler_params=pltpu.CompilerParams(
            dimension_semantics=("parallel",),
            vmem_limit_bytes=vmem_limit_bytes),
    )(wa, wm, b_flat, xr)

    return out.reshape(N, C, H, W)


def spatial_attention_ref(x, conv_w, conv_b):
    """Pure-JAX reference matching the PyTorch SpatialAttention module."""
    avg = jnp.mean(x, axis=1, keepdims=True)
    mx = jnp.max(x, axis=1, keepdims=True)
    feat = jnp.concatenate([avg, mx], axis=1)               # (N, 2, H, W)
    P = conv_w.shape[-1] // 2
    attn = jax.lax.conv_general_dilated(
        feat, conv_w, window_strides=(1, 1), padding=[(P, P), (P, P)],
        dimension_numbers=("NCHW", "OIHW", "NCHW"),
        precision=jax.lax.Precision.HIGHEST)
    attn = jax.nn.sigmoid(attn + conv_b.reshape(1, 1, 1, 1))
    return x * attn


if __name__ == "__main__":
    # SpatialAttention(kernel_size=7): conv weight (1, 2, 7, 7), bias (1,)
    N, C, H, W = 2, 4, 16, 16
    K = 7

    key = jax.random.PRNGKey(0)
    kx, kw, kb = jax.random.split(key, 3)
    x = jax.random.normal(kx, (N, C, H, W), dtype=jnp.float32)
    conv_w = jax.random.normal(kw, (1, 2, K, K), dtype=jnp.float32) * 0.1
    conv_b = jax.random.normal(kb, (1,), dtype=jnp.float32) * 0.1

    out = spatial_attention(x, conv_w, conv_b)
    jax.block_until_ready(out)

    ref = spatial_attention_ref(x, conv_w, conv_b)
    assert out.shape == (N, C, H, W)
    # MXU banded-matmul conv vs XLA conv: different summation order / hw path.
    assert jnp.allclose(out, ref, atol=1e-3, rtol=1e-3), (
        f"mismatch vs reference: max abs err "
        f"{float(jnp.max(jnp.abs(out - ref))):.3e}")

    print("KERNEL_OK")
</pallas_src>

<mosaic_0001>
module attributes {stable_mosaic.version = 11 : i64} {
  func.func @_spatial_attention_kernel(%arg0: i32, %arg1: memref<256x256xf32, #tpu.memory_space<vmem>>, %arg2: memref<256x256xf32, #tpu.memory_space<vmem>>, %arg3: memref<1xf32, #tpu.memory_space<smem>>, %arg4: memref<2x4x256xf32, #tpu.memory_space<vmem>>, %arg5: memref<2x4x256xf32, #tpu.memory_space<vmem>>) attributes {dimension_semantics = [#tpu.dimension_semantics<parallel>], iteration_bounds = array<i64: 1>, scalar_prefetch = 0 : i64, scratch_operands = 0 : i64, tpu.core_type = #tpu.core_type<tc>, window_params = [{pipeline_mode = #tpu.pipeline_mode<synchronous>, transform_indices = @transform_0, window_bounds = array<i64: 256, 256>}, {pipeline_mode = #tpu.pipeline_mode<synchronous>, transform_indices = @transform_1, window_bounds = array<i64: 256, 256>}, {transform_indices = @transform_2, window_bounds = array<i64: 1>}, {transform_indices = @transform_3, window_bounds = array<i64: 2, 4, 256>}, {transform_indices = @transform_4, window_bounds = array<i64: 2, 4, 256>}]} {
    %c0 = arith.constant 0 : index
    %c0_0 = arith.constant 0 : index
    %c0_1 = arith.constant 0 : index
    %0 = vector.load %arg4[%c0, %c0_0, %c0_1] : memref<2x4x256xf32, #tpu.memory_space<vmem>>, vector<2x4x256xf32>
    %cst = arith.constant dense<0.000000e+00> : vector<2x256xf32>
    %1 = vector.multi_reduction <add>, %0, %cst [1] : vector<2x4x256xf32> to vector<2x256xf32>
    %cst_2 = arith.constant 4.000000e+00 : f32
    %2 = vector.broadcast %cst_2 : f32 to vector<2x256xf32>
    %3 = arith.divf %1, %2 : vector<2x256xf32>
    %cst_3 = arith.constant dense<0xFF800000> : vector<2x256xf32>
    %4 = vector.multi_reduction <maximumf>, %0, %cst_3 [1] : vector<2x4x256xf32> to vector<2x256xf32>
    %c0_4 = arith.constant 0 : index
    %c0_5 = arith.constant 0 : index
    %5 = vector.load %arg1[%c0_4, %c0_5] : memref<256x256xf32, #tpu.memory_space<vmem>>, vector<256x256xf32>
    %cst_6 = arith.constant dense<0.000000e+00> : vector<2x256xf32>
    %6 = tpu.matmul %3, %5, %cst_6 {dimension_numbers = #tpu.dot_dimension_numbers<[1], [0], [0], [1], [0, 0, 1, 1], [], []>} : vector<2x256xf32>, vector<256x256xf32>, vector<2x256xf32> -> vector<2x256xf32>
    %c0_7 = arith.constant 0 : index
    %c0_8 = arith.constant 0 : index
    %7 = vector.load %arg2[%c0_7, %c0_8] : memref<256x256xf32, #tpu.memory_space<vmem>>, vector<256x256xf32>
    %cst_9 = arith.constant dense<0.000000e+00> : vector<2x256xf32>
    %8 = tpu.matmul %4, %7, %cst_9 {dimension_numbers = #tpu.dot_dimension_numbers<[1], [0], [0], [1], [0, 0, 1, 1], [], []>} : vector<2x256xf32>, vector<256x256xf32>, vector<2x256xf32> -> vector<2x256xf32>
    %9 = arith.addf %6, %8 : vector<2x256xf32>
    %c0_10 = arith.constant 0 : index
    %10 = memref.load %arg3[%c0_10] : memref<1xf32, #tpu.memory_space<smem>>
    %11 = vector.broadcast %10 : f32 to vector<2x256xf32>
    %12 = arith.addf %9, %11 : vector<2x256xf32>
    %13 = arith.negf %12 : vector<2x256xf32>
    %14 = math.exp %13 : vector<2x256xf32>
    %cst_11 = arith.constant 1.000000e+00 : f32
    %15 = vector.broadcast %cst_11 : f32 to vector<2x256xf32>
    %16 = arith.addf %15, %14 : vector<2x256xf32>
    %17 = arith.divf %15, %16 : vector<2x256xf32>
    %c0_12 = arith.constant 0 : index
    %c0_13 = arith.constant 0 : index
    %c0_14 = arith.constant 0 : index
    %18 = vector.load %arg4[%c0_12, %c0_13, %c0_14] : memref<2x4x256xf32, #tpu.memory_space<vmem>>, vector<2x4x256xf32>
    %19 = vector.shape_cast %17 : vector<2x256xf32> to vector<2x1x256xf32>
    %20 = vector.broadcast %19 : vector<2x1x256xf32> to vector<2x4x256xf32>
    %21 = arith.mulf %18, %20 : vector<2x4x256xf32>
    %c0_15 = arith.constant 0 : index
    %c0_16 = arith.constant 0 : index
    %c0_17 = arith.constant 0 : index
    %22 = vector.load %arg5[%c0_15, %c0_16, %c0_17] : memref<2x4x256xf32, #tpu.memory_space<vmem>>, vector<2x4x256xf32>
    tpu.vector_store %arg5[%c0_15, %c0_16, %c0_17], %21 {strides = array<i32>} : memref<2x4x256xf32, #tpu.memory_space<vmem>>, vector<2x4x256xf32>,
    return
  }
  func.func @transform_0(%arg0: i32) -> (i32, i32) {
    %c0_i32 = arith.constant 0 : i32
    %c0_i32_0 = arith.constant 0 : i32
    %c0_i32_1 = arith.constant 0 : i32
    return %c0_i32, %c0_i32_0 : i32, i32
  }
  func.func @transform_1(%arg0: i32) -> (i32, i32) {
    %c0_i32 = arith.constant 0 : i32
    %c0_i32_0 = arith.constant 0 : i32
    %c0_i32_1 = arith.constant 0 : i32
    return %c0_i32, %c0_i32_0 : i32, i32
  }
  func.func @transform_2(%arg0: i32) -> i32 {
    %c0_i32 = arith.constant 0 : i32
    %c0_i32_0 = arith.constant 0 : i32
    return %c0_i32 : i32
  }
  func.func @transform_3(%arg0: i32) -> (i32, i32, i32) {
    %c0_i32 = arith.constant 0 : i32
    %c0_i32_0 = arith.constant 0 : i32
    %c0_i32_1 = arith.constant 0 : i32
    return %arg0, %c0_i32, %c0_i32_0 : i32, i32, i32
  }
  func.func @transform_4(%arg0: i32) -> (i32, i32, i32) {
    %c0_i32 = arith.constant 0 : i32
    %c0_i32_0 = arith.constant 0 : i32
    %c0_i32_1 = arith.constant 0 : i32
    return %arg0, %c0_i32, %c0_i32_0 : i32, i32, i32
  }
}

</mosaic_0001>

<llo_original>
// kernel: tpu_custom_call.1
$region0: #{tpu_custom_call.1}
  #allocation0 [shape = 'u32[]', space=smem, size = 0x4, offset = 0x4, fixed_abs, tag = 'smem constant byte address 0x4 - core index']
  #allocation1 [shape = 'u32[72,128]{1,0:T(1,128)}', space=vmem, size = 0x9000, scoped, tag = 'internal scratch']
  #allocation2 [shape = 'f32[1]{0:T(128)S(6)}', space=smem, size = 0x200, scoped, tag = 'scoped memory for tpu_custom_call.1']
  %s0 = inlined_call_operand.hbm [shape: f32[256,256], index: 0, kind: input, shape index: {}]
  %s1 = inlined_call_operand.hbm [shape: f32[256,256], index: 1, kind: input, shape index: {}]
  %s2 = inlined_call_operand.<no memory space> [shape: f32[1], index: 2, kind: input, shape index: {}]
  %s3 = inlined_call_operand.hbm [shape: f32[2,4,256], index: 3, kind: input, shape index: {}]
  %s4 = inlined_call_operand.hbm [shape: f32[2,4,256], index: 4, kind: output, shape index: {}]
  %s5 = sld [smem:[#allocation0]]
  $region38: #{tpu_custom_call.1} parent=0
    _
  %s7 = ssub.s32 1, %s5
  %s8 = scalar_select 0, %s7, %s5
  %9 = sst [smem:[#allocation2]] %s2
  $region1: #{tpu_custom_call.1} parent=0
    #allocation3 [shape = 'u8[262144]{0}', space=vmem, size = 0x40000, scoped, tag = 'input window, operand 0, single buffered']
    #allocation4 [shape = 's32[1]{0}', space=sflag, size = 0x4, scoped, tag = 'scoped memory for tpu_custom_call.1']
    #allocation5 [shape = 's32[1]{0}', space=sflag, size = 0x4, scoped, tag = 'scoped memory for tpu_custom_call.1']
    #allocation6 [shape = 'u8[262144]{0}', space=vmem, size = 0x40000, scoped, tag = 'input window, operand 1, single buffered']
    #allocation7 [shape = 's32[1]{0}', space=sflag, size = 0x4, scoped, tag = 'scoped memory for tpu_custom_call.1']
    #allocation8 [shape = 'u8[8192]{0}', space=vmem, size = 0x2000, scoped, tag = 'input window, operand 3, single buffered']
    #allocation9 [shape = 'u8[8192]{0}', space=vmem, size = 0x2000, scoped, tag = 'output window, operand 0, single buffered']
    %10 = vsyncpa [#allocation4], 0
    %11 = vsyncpa [#allocation7], 0
    %12 = vsyncpa [#allocation5], 0
    // Predicated region
    $region2: #{tpu_custom_call.1} parent=1 // pred_check
      _
    $region3: #{tpu_custom_call.1} parent=1 // pred_check_branch
      %14 = sbr.rel (0) target = $region5
    $region4: #{tpu_custom_call.1} parent=1 // pred_region
      %16 = vsyncadd [#allocation4], 0
      %s17 = sshll.u32 %s0, 4
      %s18 = int_to_ptr.hbm [resolvable:$true] %s17
      %s19 = sshll.u32 [#allocation3], 4
      %s20 = int_to_ptr.vmem [resolvable:$true] %s19
      %25 = dma.hbm_to_vmem [thread:$0]  %s18, 8192, %s20, [#allocation4], 256, 256, 16
    $region5: #{tpu_custom_call.1} parent=1 // pred_fallthru
      _
    // Predicated region
    $region6: #{tpu_custom_call.1} parent=1 // pred_check
      _
    $region7: #{tpu_custom_call.1} parent=1 // pred_check_branch
      %27 = sbr.rel (0) target = $region9
    $region8: #{tpu_custom_call.1} parent=1 // pred_region
      %29 = vsyncadd [#allocation7], 0
      %s30 = sshll.u32 %s1, 4
      %s31 = int_to_ptr.hbm [resolvable:$true] %s30
      %s32 = sshll.u32 [#allocation6], 4
      %s33 = int_to_ptr.vmem [resolvable:$true] %s32
      %38 = dma.hbm_to_vmem [thread:$0]  %s31, 8192, %s33, [#allocation7], 256, 256, 16
    $region9: #{tpu_custom_call.1} parent=1 // pred_fallthru
      _
    // Predicated region
    $region10: #{tpu_custom_call.1} parent=1 // pred_check
      _
    $region11: #{tpu_custom_call.1} parent=1 // pred_check_branch
      %40 = sbr.rel (0) target = $region13
    $region12: #{tpu_custom_call.1} parent=1 // pred_region
      _
    $region13: #{tpu_custom_call.1} parent=1 // pred_fallthru
      _
    // Predicated region
    $region14: #{tpu_custom_call.1} parent=1 // pred_check
      _
    $region15: #{tpu_custom_call.1} parent=1 // pred_check_branch
      %42 = sbr.rel (0) target = $region17
    $region16: #{tpu_custom_call.1} parent=1 // pred_region
      %44 = vsyncadd [#allocation7], 0
      %s45 = sshll.u32 %s3, 4
      %s46 = int_to_ptr.hbm [resolvable:$true] %s45
      %s47 = sshll.u32 [#allocation8], 4
      %s48 = int_to_ptr.vmem [resolvable:$true] %s47
      %53 = dma.hbm_to_vmem [thread:$0]  %s46, 256, %s48, [#allocation7], 128, 128, 8
    $region17: #{tpu_custom_call.1} parent=1 // pred_fallthru
      _
    // Predicated region
    $region18: #{tpu_custom_call.1} parent=1 // pred_check
      _
    $region19: #{tpu_custom_call.1} parent=1 // pred_check_branch
      %55 = sbr.rel (0) target = $region21
    $region20: #{tpu_custom_call.1} parent=1 // pred_region
      %57 = dma.done [#allocation4], 8192
    $region21: #{tpu_custom_call.1} parent=1 // pred_fallthru
      _
    // Predicated region
    $region22: #{tpu_custom_call.1} parent=1 // pred_check
      _
    $region23: #{tpu_custom_call.1} parent=1 // pred_check_branch
      %59 = sbr.rel (0) target = $region25
    $region24: #{tpu_custom_call.1} parent=1 // pred_region
      %61 = dma.done [#allocation7], 8192
    $region25: #{tpu_custom_call.1} parent=1 // pred_fallthru
      _
    // Predicated region
    $region26: #{tpu_custom_call.1} parent=1 // pred_check
      _
    $region27: #{tpu_custom_call.1} parent=1 // pred_check_branch
      %63 = sbr.rel (0) target = $region29
    $region28: #{tpu_custom_call.1} parent=1 // pred_region
      %65 = dma.done [#allocation7], 256
    $region29: #{tpu_custom_call.1} parent=1 // pred_fallthru
      _
    %v66 = vld [vmem:[#allocation8] sm:$0xff]
    %v67 = vld [vmem:[#allocation8 + $0x8] sm:$0xff]
    %70 = vst [vmem:[#allocation1] ss:$2 sm:$0xff] %v66
    %v71 = vld.sshfl [vmem:[#allocation1] sm:$0xff pattern:$0x75316420]
    %v72 = vld.sshfl [vmem:[#allocation1 + $0x8] sm:$0xff pattern:$0x75316420]
    %s73 = scalar_lea.vmem [#allocation1], 16
    %74 = vst [vmem:[%s73] ss:$2 sm:$0xff] %v67
    %v75 = vld.sshfl [vmem:[#allocation1 + $0x10] sm:$0xff pattern:$0x75316420]
    %v76 = vld.sshfl [vmem:[#allocation1 + $0x18] sm:$0xff pattern:$0x75316420]
    %vm81 = vcmask 1043456
    %v82 = vsel %vm81, %v71, 0.0
    %v83 = vrot.slane %v82, 4
    %v84 = vadd.f32 %v82, %v83
    %v85 = vrot.slane %v84, 2
    %v86 = vadd.f32 %v84, %v85
    %v87 = vrot.slane %v86, 1
    %v88 = vadd.f32 %v86, %v87
    %v89 = vsel %vm81, %v72, 0.0
    %v90 = vrot.slane %v89, 4
    %v91 = vadd.f32 %v89, %v90
    %v92 = vrot.slane %v91, 2
    %v93 = vadd.f32 %v91, %v92
    %v94 = vrot.slane %v93, 1
    %v95 = vadd.f32 %v93, %v94
    %v96 = vsel %vm81, %v75, 0.0
    %v97 = vrot.slane %v96, 4
    %v98 = vadd.f32 %v96, %v97
    %v99 = vrot.slane %v98, 2
    %v100 = vadd.f32 %v98, %v99
    %v101 = vrot.slane %v100, 1
    %v102 = vadd.f32 %v100, %v101
    %v103 = vsel %vm81, %v76, 0.0
    %v104 = vrot.slane %v103, 4
    %v105 = vadd.f32 %v103, %v104
    %v106 = vrot.slane %v105, 2
    %v107 = vadd.f32 %v105, %v106
    %v108 = vrot.slane %v107, 1
    %v109 = vadd.f32 %v107, %v108
    %v110 = vrcp.pop 4.0
    %v111 = vmul.f32 4.0, %v110
    %v112 = vsub.f32 1.0, %v111
    %v113 = vmul.f32 %v110, %v112
    %v114 = vadd.f32 %v110, %v113
    %vm115 = vweird.f32 %v110
    %v116 = vsel %vm115, %v110, %v114
    %v117 = vmul.f32 %v88, %v116
    %v118 = vmul.f32 %v95, %v116
    %v119 = vmul.f32 %v102, %v116
    %v120 = vmul.f32 %v109, %v116
    %121 = vst [vmem:[#allocation1] ss:$2 sm:$0xff] %v66
    %v122 = vld.sshfl [vmem:[#allocation1] sm:$0xff pattern:$0x75316420]
    %v123 = vld.sshfl [vmem:[#allocation1 + $0x8] sm:$0xff pattern:$0x75316420]
    %s124 = scalar_lea.vmem [#allocation1], 16
    %125 = vst [vmem:[%s124] ss:$2 sm:$0xff] %v67
    %v126 = vld.sshfl [vmem:[#allocation1 + $0x10] sm:$0xff pattern:$0x75316420]
    %v127 = vld.sshfl [vmem:[#allocation1 + $0x18] sm:$0xff pattern:$0x75316420]
    %v132 = vsel %vm81, %v122, -inf
    %v133 = vrot.slane %v132, 4
    %v134 = vmax.f32 %v132, %v133
    %v135 = vrot.slane %v134, 2
    %v136 = vmax.f32 %v134, %v135
    %v137 = vrot.slane %v136, 1
    %v138 = vmax.f32 %v136, %v137
    %v139 = vsel %vm81, %v123, -inf
    %v140 = vrot.slane %v139, 4
    %v141 = vmax.f32 %v139, %v140
    %v142 = vrot.slane %v141, 2
    %v143 = vmax.f32 %v141, %v142
    %v144 = vrot.slane %v143, 1
    %v145 = vmax.f32 %v143, %v144
    %v146 = vsel %vm81, %v126, -inf
    %v147 = vrot.slane %v146, 4
    %v148 = vmax.f32 %v146, %v147
    %v149 = vrot.slane %v148, 2
    %v150 = vmax.f32 %v148, %v149
    %v151 = vrot.slane %v150, 1
    %v152 = vmax.f32 %v150, %v151
    %v153 = vsel %vm81, %v127, -inf
    %v154 = vrot.slane %v153, 4
    %v155 = vmax.f32 %v153, %v154
    %v156 = vrot.slane %v155, 2
    %v157 = vmax.f32 %v155, %v156
    %v158 = vrot.slane %v157, 1
    %v159 = vmax.f32 %v157, %v158
    %v160 = vld [vmem:[#allocation3] sm:$0xff]
    %v161 = vld [vmem:[#allocation3 + $0x8] sm:$0xff]
    %v162 = vld [vmem:[#allocation3 + $0x10] sm:$0xff]
    %v163 = vld [vmem:[#allocation3 + $0x18] sm:$0xff]
    %v164 = vld [vmem:[#allocation3 + $0x20] sm:$0xff]
    %v165 = vld [vmem:[#allocation3 + $0x28] sm:$0xff]
    %v166 = vld [vmem:[#allocation3 + $0x30] sm:$0xff]
    %v167 = vld [vmem:[#allocation3 + $0x38] sm:$0xff]
    %v168 = vld [vmem:[#allocation3 + $0x40] sm:$0xff]
    %v169 = vld [vmem:[#allocation3 + $0x48] sm:$0xff]
    %v170 = vld [vmem:[#allocation3 + $0x50] sm:$0xff]
    %v171 = vld [vmem:[#allocation3 + $0x58] sm:$0xff]
    %v172 = vld [vmem:[#allocation3 + $0x60] sm:$0xff]
    %v173 = vld [vmem:[#allocation3 + $0x68] sm:$0xff]
    %v174 = vld [vmem:[#allocation3 + $0x70] sm:$0xff]
    %v175 = vld [vmem:[#allocation3 + $0x78] sm:$0xff]
    %v176 = vld [vmem:[#allocation3 + $0x80] sm:$0xff]
    %v177 = vld [vmem:[#allocation3 + $0x88] sm:$0xff]
    %v178 = vld [vmem:[#allocation3 + $0x90] sm:$0xff]
    %v179 = vld [vmem:[#allocation3 + $0x98] sm:$0xff]
    %v180 = vld [vmem:[#allocation3 + $0xa0] sm:$0xff]
    %v181 = vld [vmem:[#allocation3 + $0xa8] sm:$0xff]
    %v182 = vld [vmem:[#allocation3 + $0xb0] sm:$0xff]
    %v183 = vld [vmem:[#allocation3 + $0xb8] sm:$0xff]
    %v184 = vld [vmem:[#allocation3 + $0xc0] sm:$0xff]
    %v185 = vld [vmem:[#allocation3 + $0xc8] sm:$0xff]
    %v186 = vld [vmem:[#allocation3 + $0xd0] sm:$0xff]
    %v187 = vld [vmem:[#allocation3 + $0xd8] sm:$0xff]
    %v188 = vld [vmem:[#allocation3 + $0xe0] sm:$0xff]
    %v189 = vld [vmem:[#allocation3 + $0xe8] sm:$0xff]
    %v190 = vld [vmem:[#allocation3 + $0xf0] sm:$0xff]
    %v191 = vld [vmem:[#allocation3 + $0xf8] sm:$0xff]
    %v192 = vld [vmem:[#allocation3 + $0x100] sm:$0xff]
    %v193 = vld [vmem:[#allocation3 + $0x108] sm:$0xff]
    %v194 = vld [vmem:[#allocation3 + $0x110] sm:$0xff]
    %v195 = vld [vmem:[#allocation3 + $0x118] sm:$0xff]
    %v196 = vld [vmem:[#allocation3 + $0x120] sm:$0xff]
    %v197 = vld [vmem:[#allocation3 + $0x128] sm:$0xff]
    %v198 = vld [vmem:[#allocation3 + $0x130] sm:$0xff]
    %v199 = vld [vmem:[#allocation3 + $0x138] sm:$0xff]
    %v200 = vld [vmem:[#allocation3 + $0x140] sm:$0xff]
    %v201 = vld [vmem:[#allocation3 + $0x148] sm:$0xff]
    %v202 = vld [vmem:[#allocation3 + $0x150] sm:$0xff]
    %v203 = vld [vmem:[#allocation3 + $0x158] sm:$0xff]
    %v204 = vld [vmem:[#allocation3 + $0x160] sm:$0xff]
    %v205 = vld [vmem:[#allocation3 + $0x168] sm:$0xff]
    %v206 = vld [vmem:[#allocation3 + $0x170] sm:$0xff]
    %v207 = vld [vmem:[#allocation3 + $0x178] sm:$0xff]
    %v208 = vld [vmem:[#allocation3 + $0x180] sm:$0xff]
    %v209 = vld [vmem:[#allocation3 + $0x188] sm:$0xff]
    %v210 = vld [vmem:[#allocation3 + $0x190] sm:$0xff]
    %v211 = vld [vmem:[#allocation3 + $0x198] sm:$0xff]
    %v212 = vld [vmem:[#allocation3 + $0x1a0] sm:$0xff]
    %v213 = vld [vmem:[#allocation3 + $0x1a8] sm:$0xff]
    %v214 = vld [vmem:[#allocation3 + $0x1b0] sm:$0xff]
    %v215 = vld [vmem:[#allocation3 + $0x1b8] sm:$0xff]
    %v216 = vld [vmem:[#allocation3 + $0x1c0] sm:$0xff]
    %v217 = vld [vmem:[#allocation3 + $0x1c8] sm:$0xff]
    %v218 = vld [vmem:[#allocation3 + $0x1d0] sm:$0xff]
    %v219 = vld [vmem:[#allocation3 + $0x1d8] sm:$0xff]
    %v220 = vld [vmem:[#allocation3 + $0x1e0] sm:$0xff]
    %v221 = vld [vmem:[#allocation3 + $0x1e8] sm:$0xff]
    %v222 = vld [vmem:[#allocation3 + $0x1f0] sm:$0xff]
    %v223 = vld [vmem:[#allocation3 + $0x1f8] sm:$0xff]
    %v224 = vld [vmem:[#allocation6] sm:$0xff]
    %v225 = vld [vmem:[#allocation6 + $0x8] sm:$0xff]
    %v226 = vld [vmem:[#allocation6 + $0x10] sm:$0xff]
    %v227 = vld [vmem:[#allocation6 + $0x18] sm:$0xff]
    %v228 = vld [vmem:[#allocation6 + $0x20] sm:$0xff]
    %v229 = vld [vmem:[#allocation6 + $0x28] sm:$0xff]
    %v230 = vld [vmem:[#allocation6 + $0x30] sm:$0xff]
    %v231 = vld [vmem:[#allocation6 + $0x38] sm:$0xff]
    %v232 = vld [vmem:[#allocation6 + $0x40] sm:$0xff]
    %v233 = vld [vmem:[#allocation6 + $0x48] sm:$0xff]
    %v234 = vld [vmem:[#allocation6 + $0x50] sm:$0xff]
    %v235 = vld [vmem:[#allocation6 + $0x58] sm:$0xff]
    %v236 = vld [vmem:[#allocation6 + $0x60] sm:$0xff]
    %v237 = vld [vmem:[#allocation6 + $0x68] sm:$0xff]
    %v238 = vld [vmem:[#allocation6 + $0x70] sm:$0xff]
    %v239 = vld [vmem:[#allocation6 + $0x78] sm:$0xff]
    %v240 = vld [vmem:[#allocation6 + $0x80] sm:$0xff]
    %v241 = vld [vmem:[#allocation6 + $0x88] sm:$0xff]
    %v242 = vld [vmem:[#allocation6 + $0x90] sm:$0xff]
    %v243 = vld [vmem:[#allocation6 + $0x98] sm:$0xff]
    %v244 = vld [vmem:[#allocation6 + $0xa0] sm:$0xff]
    %v245 = vld [vmem:[#allocation6 + $0xa8] sm:$0xff]
    %v246 = vld [vmem:[#allocation6 + $0xb0] sm:$0xff]
    %v247 = vld [vmem:[#allocation6 + $0xb8] sm:$0xff]
    %v248 = vld [vmem:[#allocation6 + $0xc0] sm:$0xff]
    %v249 = vld [vmem:[#allocation6 + $0xc8] sm:$0xff]
    %v250 = vld [vmem:[#allocation6 + $0xd0] sm:$0xff]
    %v251 = vld [vmem:[#allocation6 + $0xd8] sm:$0xff]
    %v252 = vld [vmem:[#allocation6 + $0xe0] sm:$0xff]
    %v253 = vld [vmem:[#allocation6 + $0xe8] sm:$0xff]
    %v254 = vld [vmem:[#allocation6 + $0xf0] sm:$0xff]
    %v255 = vld [vmem:[#allocation6 + $0xf8] sm:$0xff]
    %v256 = vld [vmem:[#allocation6 + $0x100] sm:$0xff]
    %v257 = vld [vmem:[#allocation6 + $0x108] sm:$0xff]
    %v258 = vld [vmem:[#allocation6 + $0x110] sm:$0xff]
    %v259 = vld [vmem:[#allocation6 + $0x118] sm:$0xff]
    %v260 = vld [vmem:[#allocation6 + $0x120] sm:$0xff]
    %v261 = vld [vmem:[#allocation6 + $0x128] sm:$0xff]
    %v262 = vld [vmem:[#allocation6 + $0x130] sm:$0xff]
    %v263 = vld [vmem:[#allocation6 + $0x138] sm:$0xff]
    %v264 = vld [vmem:[#allocation6 + $0x140] sm:$0xff]
    %v265 = vld [vmem:[#allocation6 + $0x148] sm:$0xff]
    %v266 = vld [vmem:[#allocation6 + $0x150] sm:$0xff]
    %v267 = vld [vmem:[#allocation6 + $0x158] sm:$0xff]
    %v268 = vld [vmem:[#allocation6 + $0x160] sm:$0xff]
    %v269 = vld [vmem:[#allocation6 + $0x168] sm:$0xff]
    %v270 = vld [vmem:[#allocation6 + $0x170] sm:$0xff]
    %v271 = vld [vmem:[#allocation6 + $0x178] sm:$0xff]
    %v272 = vld [vmem:[#allocation6 + $0x180] sm:$0xff]
    %v273 = vld [vmem:[#allocation6 + $0x188] sm:$0xff]
    %v274 = vld [vmem:[#allocation6 + $0x190] sm:$0xff]
    %v275 = vld [vmem:[#allocation6 + $0x198] sm:$0xff]
    %v276 = vld [vmem:[#allocation6 + $0x1a0] sm:$0xff]
    %v277 = vld [vmem:[#allocation6 + $0x1a8] sm:$0xff]
    %v278 = vld [vmem:[#allocation6 + $0x1b0] sm:$0xff]
    %v279 = vld [vmem:[#allocation6 + $0x1b8] sm:$0xff]
    %v280 = vld [vmem:[#allocation6 + $0x1c0] sm:$0xff]
    %v281 = vld [vmem:[#allocation6 + $0x1c8] sm:$0xff]
    %v282 = vld [vmem:[#allocation6 + $0x1d0] sm:$0xff]
    %v283 = vld [vmem:[#allocation6 + $0x1d8] sm:$0xff]
    %v284 = vld [vmem:[#allocation6 + $0x1e0] sm:$0xff]
    %v285 = vld [vmem:[#allocation6 + $0x1e8] sm:$0xff]
    %v286 = vld [vmem:[#allocation6 + $0x1f0] sm:$0xff]
    %v287 = vld [vmem:[#allocation6 + $0x1f8] sm:$0xff]
    %vm292 = vcmask 1041409
    %v293 = vsel %vm292, %v152, %v138
    %v294 = vsel %vm292, %v159, %v145
    %297 = vmatpush.msra.mxu0 %v254
    %298 = vmatpush.msra.mxu0 %v252
    %299 = vmatpush.msra.mxu0 %v250
    %300 = vmatpush.msra.mxu0 %v248
    %301 = vmatpush.msra.mxu0 %v246
    %302 = vmatpush.msra.mxu0 %v244
    %303 = vmatpush.msra.mxu0 %v242
    %304 = vmatpush.msra.mxu0 %v240
    %305 = vmatpush.msra.mxu0 %v238
    %306 = vmatpush.msra.mxu0 %v236
    %307 = vmatpush.msra.mxu0 %v234
    %308 = vmatpush.msra.mxu0 %v232
    %309 = vmatpush.msra.mxu0 %v230
    %310 = vmatpush.msra.mxu0 %v228
    %311 = vmatpush.msra.mxu0 %v226
    %312 = vmatpush.msra.mxu0 %v224
    %313 = vmatmul.f32.gmra.mxu0 %v293
    %v314 = vpop.f32.mrf.mxu0
    %v315 = vadd.f32 0.0, %v314
    %316 = vdwg.mxu0
    %317 = vmatpush.msra.mxu0 %v286
    %318 = vmatpush.msra.mxu0 %v284
    %319 = vmatpush.msra.mxu0 %v282
    %320 = vmatpush.msra.mxu0 %v280
    %321 = vmatpush.msra.mxu0 %v278
    %322 = vmatpush.msra.mxu0 %v276
    %323 = vmatpush.msra.mxu0 %v274
    %324 = vmatpush.msra.mxu0 %v272
    %325 = vmatpush.msra.mxu0 %v270
    %326 = vmatpush.msra.mxu0 %v268
    %327 = vmatpush.msra.mxu0 %v266
    %328 = vmatpush.msra.mxu0 %v264
    %329 = vmatpush.msra.mxu0 %v262
    %330 = vmatpush.msra.mxu0 %v260
    %331 = vmatpush.msra.mxu0 %v258
    %332 = vmatpush.msra.mxu0 %v256
    %333 = vmatmul.f32.gmra.mxu0 %v294
    %v334 = vpop.f32.mrf.mxu0
    %v335 = vadd.f32 %v315, %v334
    %336 = vdwg.mxu0
    %337 = vmatpush.msra.mxu0 %v255
    %338 = vmatpush.msra.mxu0 %v253
    %339 = vmatpush.msra.mxu0 %v251
    %340 = vmatpush.msra.mxu0 %v249
    %341 = vmatpush.msra.mxu0 %v247
    %342 = vmatpush.msra.mxu0 %v245
    %343 = vmatpush.msra.mxu0 %v243
    %344 = vmatpush.msra.mxu0 %v241
    %345 = vmatpush.msra.mxu0 %v239
    %346 = vmatpush.msra.mxu0 %v237
    %347 = vmatpush.msra.mxu0 %v235
    %348 = vmatpush.msra.mxu0 %v233
    %349 = vmatpush.msra.mxu0 %v231
    %350 = vmatpush.msra.mxu0 %v229
    %351 = vmatpush.msra.mxu0 %v227
    %352 = vmatpush.msra.mxu0 %v225
    %353 = vmatmul.f32.gmra.mxu0 %v293
    %v354 = vpop.f32.mrf.mxu0
    %v355 = vadd.f32 0.0, %v354
    %356 = vdwg.mxu0
    %357 = vmatpush.msra.mxu0 %v287
    %358 = vmatpush.msra.mxu0 %v285
    %359 = vmatpush.msra.mxu0 %v283
    %360 = vmatpush.msra.mxu0 %v281
    %361 = vmatpush.msra.mxu0 %v279
    %362 = vmatpush.msra.mxu0 %v277
    %363 = vmatpush.msra.mxu0 %v275
    %364 = vmatpush.msra.mxu0 %v273
    %365 = vmatpush.msra.mxu0 %v271
    %366 = vmatpush.msra.mxu0 %v269
    %367 = vmatpush.msra.mxu0 %v267
    %368 = vmatpush.msra.mxu0 %v265
    %369 = vmatpush.msra.mxu0 %v263
    %370 = vmatpush.msra.mxu0 %v261
    %371 = vmatpush.msra.mxu0 %v259
    %372 = vmatpush.msra.mxu0 %v257
    %373 = vmatmul.f32.gmra.mxu0 %v294
    %v374 = vpop.f32.mrf.mxu0
    %v375 = vadd.f32 %v355, %v374
    %376 = vdwg.mxu0
    %v381 = vsel %vm292, %v119, %v117
    %v382 = vsel %vm292, %v120, %v118
    %385 = vmatpush.msra.mxu0 %v190
    %386 = vmatpush.msra.mxu0 %v188
    %387 = vmatpush.msra.mxu0 %v186
    %388 = vmatpush.msra.mxu0 %v184
    %389 = vmatpush.msra.mxu0 %v182
    %390 = vmatpush.msra.mxu0 %v180
    %391 = vmatpush.msra.mxu0 %v178
    %392 = vmatpush.msra.mxu0 %v176
    %393 = vmatpush.msra.mxu0 %v174
    %394 = vmatpush.msra.mxu0 %v172
    %395 = vmatpush.msra.mxu0 %v170
    %396 = vmatpush.msra.mxu0 %v168
    %397 = vmatpush.msra.mxu0 %v166
    %398 = vmatpush.msra.mxu0 %v164
    %399 = vmatpush.msra.mxu0 %v162
    %400 = vmatpush.msra.mxu0 %v160
    %401 = vmatmul.f32.gmra.mxu0 %v381
    %v402 = vpop.f32.mrf.mxu0
    %v403 = vadd.f32 %v335, %v402
    %404 = vdwg.mxu0
    %405 = vmatpush.msra.mxu0 %v222
    %406 = vmatpush.msra.mxu0 %v220
    %407 = vmatpush.msra.mxu0 %v218
    %408 = vmatpush.msra.mxu0 %v216
    %409 = vmatpush.msra.mxu0 %v214
    %410 = vmatpush.msra.mxu0 %v212
    %411 = vmatpush.msra.mxu0 %v210
    %412 = vmatpush.msra.mxu0 %v208
    %413 = vmatpush.msra.mxu0 %v206
    %414 = vmatpush.msra.mxu0 %v204
    %415 = vmatpush.msra.mxu0 %v202
    %416 = vmatpush.msra.mxu0 %v200
    %417 = vmatpush.msra.mxu0 %v198
    %418 = vmatpush.msra.mxu0 %v196
    %419 = vmatpush.msra.mxu0 %v194
    %420 = vmatpush.msra.mxu0 %v192
    %421 = vmatmul.f32.gmra.mxu0 %v382
    %v422 = vpop.f32.mrf.mxu0
    %v423 = vadd.f32 %v403, %v422
    %424 = vdwg.mxu0
    %425 = vmatpush.msra.mxu0 %v191
    %426 = vmatpush.msra.mxu0 %v189
    %427 = vmatpush.msra.mxu0 %v187
    %428 = vmatpush.msra.mxu0 %v185
    %429 = vmatpush.msra.mxu0 %v183
    %430 = vmatpush.msra.mxu0 %v181
    %431 = vmatpush.msra.mxu0 %v179
    %432 = vmatpush.msra.mxu0 %v177
    %433 = vmatpush.msra.mxu0 %v175
    %434 = vmatpush.msra.mxu0 %v173
    %435 = vmatpush.msra.mxu0 %v171
    %436 = vmatpush.msra.mxu0 %v169
    %437 = vmatpush.msra.mxu0 %v167
    %438 = vmatpush.msra.mxu0 %v165
    %439 = vmatpush.msra.mxu0 %v163
    %440 = vmatpush.msra.mxu0 %v161
    %441 = vmatmul.f32.gmra.mxu0 %v381
    %v442 = vpop.f32.mrf.mxu0
    %v443 = vadd.f32 %v375, %v442
    %444 = vdwg.mxu0
    %445 = vmatpush.msra.mxu0 %v223
    %446 = vmatpush.msra.mxu0 %v221
    %447 = vmatpush.msra.mxu0 %v219
    %448 = vmatpush.msra.mxu0 %v217
    %449 = vmatpush.msra.mxu0 %v215
    %450 = vmatpush.msra.mxu0 %v213
    %451 = vmatpush.msra.mxu0 %v211
    %452 = vmatpush.msra.mxu0 %v209
    %453 = vmatpush.msra.mxu0 %v207
    %454 = vmatpush.msra.mxu0 %v205
    %455 = vmatpush.msra.mxu0 %v203
    %456 = vmatpush.msra.mxu0 %v201
    %457 = vmatpush.msra.mxu0 %v199
    %458 = vmatpush.msra.mxu0 %v197
    %459 = vmatpush.msra.mxu0 %v195
    %460 = vmatpush.msra.mxu0 %v193
    %461 = vmatmul.f32.gmra.mxu0 %v382
    %v462 = vpop.f32.mrf.mxu0
    %v463 = vadd.f32 %v443, %v462
    %464 = vdwg.mxu0
    %s465 = sld [smem:[#allocation2]]
    %v466 = vstv %s465
    %v467 = vadd.f32 %v423, %v466
    %v468 = vadd.f32 %v463, %v466
    %v469 = vxor.u32 %v467, 2147483648
    %v470 = vxor.u32 %v468, 2147483648
    %v471 = vmul.f32 %v469, 1.442695
    %v472 = vpow.pop %v471
    %v473 = vmul.f32 %v470, 1.442695
    %v474 = vpow.pop %v473
    %v475 = vadd.f32 %v472, 1.0
    %v476 = vadd.f32 %v474, 1.0
    %v477 = vrcp.pop %v475
    %v478 = vmul.f32 %v475, %v477
    %v479 = vsub.f32 1.0, %v478
    %v480 = vmul.f32 %v477, %v479
    %v481 = vadd.f32 %v477, %v480
    %vm482 = vweird.f32 %v475
    %vm483 = vweird.f32 %v477
    %vm484 = vmor %vm482, %vm483
    %v485 = vsel %vm484, %v477, %v481
    %v486 = vand.u32 2147483647, %v475
    %vm487 = vcmp.eq.f32.partialorder %v486, 8.507059e+37
    %v488 = vand.u32 %v475, 2147483648
    %v489 = vor.u32 1.1754944e-38, %v488
    %v490 = vsel %vm487, %v489, %v485
    %v491 = vmul.f32 1.0, %v490
    %v492 = vrcp.pop %v476
    %v493 = vmul.f32 %v476, %v492
    %v494 = vsub.f32 1.0, %v493
    %v495 = vmul.f32 %v492, %v494
    %v496 = vadd.f32 %v492, %v495
    %vm497 = vweird.f32 %v476
    %vm498 = vweird.f32 %v492
    %vm499 = vmor %vm497, %vm498
    %v500 = vsel %vm499, %v492, %v496
    %v501 = vand.u32 2147483647, %v476
    %vm502 = vcmp.eq.f32.partialorder %v501, 8.507059e+37
    %v503 = vand.u32 %v476, 2147483648
    %v504 = vor.u32 1.1754944e-38, %v503
    %v505 = vsel %vm502, %v504, %v500
    %v506 = vmul.f32 1.0, %v505
    %v509 = vrot.slane %v506, 7
    %vm510 = vcmask 1040384
    %v511 = vsel %vm510, %v491, %v509
    %v512 = vsel %vm292, %v491, %v509
    %v513 = vrot.slane %v512, 1
    %v514 = vperm.slane %v511, 0
    %v515 = vperm.slane %v511, 1
    %v516 = vperm.slane %v513, 0
    %v517 = vperm.slane %v513, 1
    %v518 = vrot.slane %v515, 4
    %v519 = vrot.slane %v517, 4
    %v520 = vsel %vm81, %v514, %v518
    %v521 = vsel %vm81, %v516, %v519
    %v524 = vmul.f32 %v66, %v520
    %v525 = vmul.f32 %v67, %v521
    %526 = vst [vmem:[#allocation9] sm:$0xff] %v524
    %527 = vst [vmem:[#allocation9 + $0x8] sm:$0xff] %v525
    // Predicated region
    $region30: #{tpu_custom_call.1} parent=1 // pred_check
      _
    $region31: #{tpu_custom_call.1} parent=1 // pred_check_branch
      %529 = sbr.rel (0) target = $region33
    $region32: #{tpu_custom_call.1} parent=1 // pred_region
      %531 = vsyncadd [#allocation5], 0
      %s532 = sshll.u32 [#allocation9], 4
      %s533 = int_to_ptr.vmem [resolvable:$true] %s532
      %s534 = sshll.u32 %s4, 4
      %s535 = int_to_ptr.hbm [resolvable:$true] %s534
      %540 = dma.vmem_to_hbm [thread:$0]  %s533, 256, %s535, [#allocation5], 128, 128, 8
    $region33: #{tpu_custom_call.1} parent=1 // pred_fallthru
      _
    // Predicated region
    $region34: #{tpu_custom_call.1} parent=1 // pred_check
      _
    $region35: #{tpu_custom_call.1} parent=1 // pred_check_branch
      %542 = sbr.rel (0) target = $region37
    $region36: #{tpu_custom_call.1} parent=1 // pred_region
      %544 = dma.done [#allocation5], 256
    $region37: #{tpu_custom_call.1} parent=1 // pred_fallthru
      _
    %545 = vsyncpa [#allocation4], 1
    %546 = vsyncpa [#allocation7], 1
    %547 = vsyncpa [#allocation5], 1

</llo_original>
